<compile_context>
chip_gen: v6e
topology: v6e:2x2x1
jax: 0.10.0
libtpu: 0.0.40
codegen_flags: <defaults>
</compile_context>

<pallas_src>
import functools

import jax
import jax.numpy as jnp
from jax.experimental import pallas as pl
from jax.experimental.pallas import tpu as pltpu


# ----------------------------------------------------------------------------
# Tiling helpers
# ----------------------------------------------------------------------------
_VMEM_LIMIT_BYTES = 48 * 1024 * 1024       # headroom under v7x's 64 MiB physical VMEM
_BLOCK_BUDGET_BYTES = 24 * 1024 * 1024     # total budget for double-buffered blocks


def _round_up(x, m):
    return (x + m - 1) // m * m


def _choose_tile_rows(rows, d, n_streams, dtype_bytes=4,
                      block_budget_bytes=_BLOCK_BUDGET_BYTES, max_rows=1024):
    """Largest multiple-of-8 row tile s.t. n_streams double-buffered blocks fit budget."""
    cap = block_budget_bytes // max(1, n_streams * 2 * d * dtype_bytes)
    tr = min(max_rows, cap)
    tr = min(tr, _round_up(rows, 8))
    tr = max(8, (tr // 8) * 8)
    return tr


def _pad_rows(x2d, prows):
    rows = x2d.shape[0]
    if prows == rows:
        return x2d
    return jnp.pad(x2d, ((0, prows - rows), (0, 0)))


def _compiler_params():
    return pltpu.CompilerParams(
        dimension_semantics=("parallel",),     # rows independent -> shard across TCs on v7x
        vmem_limit_bytes=_VMEM_LIMIT_BYTES,
    )


# ----------------------------------------------------------------------------
# Kernel 1: LayerNormalization (PyTorch semantics: unbiased std, scalar alpha/bias)
# ----------------------------------------------------------------------------
def _layernorm_kernel(alpha_ref, bias_ref, x_ref, o_ref, *, eps, d):
    x = x_ref[...].astype(jnp.float32)
    # One-pass statistics: sum and sum-of-squares from the same loaded vregs.
    s = jnp.sum(x, axis=-1, keepdims=True)
    sq = jnp.sum(x * x, axis=-1, keepdims=True)
    mean = s * (1.0 / d)
    # torch.std() is unbiased (divide by D-1); module does sqrt(std^2 + eps).
    var = (sq - d * mean * mean) * (1.0 / (d - 1))
    inv = jax.lax.rsqrt(var + eps)
    o_ref[...] = (alpha_ref[0] * (x - mean) * inv + bias_ref[0]).astype(o_ref.dtype)


def pallas_layernorm(x2d, alpha, bias, eps):
    rows, d = x2d.shape
    # TODO(synk): if d_model is not a multiple of 128, stores are masked (vst.msk);
    # real transformer d_model (512/1024/4096) is already lane-dense.
    tr = _choose_tile_rows(rows, d, n_streams=2)      # x in + out
    prows = _round_up(rows, tr)
    xp = _pad_rows(x2d, prows)
    kernel = functools.partial(_layernorm_kernel, eps=eps, d=d)
    out = pl.pallas_call(
        kernel,
        out_shape=jax.ShapeDtypeStruct((prows, d), x2d.dtype),
        grid=(prows // tr,),
        in_specs=[
            pl.BlockSpec(memory_space=pltpu.MemorySpace.SMEM),  # alpha (1,)
            pl.BlockSpec(memory_space=pltpu.MemorySpace.SMEM),  # bias  (1,)
            pl.BlockSpec((tr, d), lambda i: (i, 0)),
        ],
        out_specs=pl.BlockSpec((tr, d), lambda i: (i, 0)),
        compiler_params=_compiler_params(),
    )(alpha, bias, xp)
    return out[:rows] if prows != rows else out


# ----------------------------------------------------------------------------
# Kernel 2: dropout(sub_out) + residual add (training), or plain residual add (eval)
# ----------------------------------------------------------------------------
def _dropout_residual_kernel(x_ref, y_ref, bits_ref, o_ref, *, rate):
    x = x_ref[...].astype(jnp.float32)
    y = y_ref[...].astype(jnp.float32)
    # Inverted dropout: keep w.p. 1-p, scale kept activations by 1/(1-p).
    # Integer threshold compare on raw uint32 bits (no shift / int->float convert).
    thresh = min(int(round(rate * 4294967296.0)), 4294967295)
    keep = bits_ref[...] >= jnp.uint32(thresh)
    y = jnp.where(keep, y * (1.0 / (1.0 - rate)), 0.0)
    o_ref[...] = (x + y).astype(o_ref.dtype)


def _residual_add_kernel(x_ref, y_ref, o_ref):
    x = x_ref[...].astype(jnp.float32)
    y = y_ref[...].astype(jnp.float32)
    o_ref[...] = (x + y).astype(o_ref.dtype)


def pallas_dropout_residual(x2d, y2d, rate, bits2d):
    rows, d = x2d.shape
    tr = _choose_tile_rows(rows, d, n_streams=4)      # x, y, bits in + out
    prows = _round_up(rows, tr)
    xp, yp, bp = _pad_rows(x2d, prows), _pad_rows(y2d, prows), _pad_rows(bits2d, prows)
    kernel = functools.partial(_dropout_residual_kernel, rate=rate)
    out = pl.pallas_call(
        kernel,
        out_shape=jax.ShapeDtypeStruct((prows, d), x2d.dtype),
        grid=(prows // tr,),
        in_specs=[
            pl.BlockSpec((tr, d), lambda i: (i, 0)),
            pl.BlockSpec((tr, d), lambda i: (i, 0)),
            pl.BlockSpec((tr, d), lambda i: (i, 0)),
        ],
        out_specs=pl.BlockSpec((tr, d), lambda i: (i, 0)),
        compiler_params=_compiler_params(),
    )(xp, yp, bp)
    return out[:rows] if prows != rows else out


def pallas_residual_add(x2d, y2d):
    rows, d = x2d.shape
    tr = _choose_tile_rows(rows, d, n_streams=3)      # x, y in + out
    prows = _round_up(rows, tr)
    xp, yp = _pad_rows(x2d, prows), _pad_rows(y2d, prows)
    out = pl.pallas_call(
        _residual_add_kernel,
        out_shape=jax.ShapeDtypeStruct((prows, d), x2d.dtype),
        grid=(prows // tr,),
        in_specs=[
            pl.BlockSpec((tr, d), lambda i: (i, 0)),
            pl.BlockSpec((tr, d), lambda i: (i, 0)),
        ],
        out_specs=pl.BlockSpec((tr, d), lambda i: (i, 0)),
        compiler_params=_compiler_params(),
    )(xp, yp)
    return out[:rows] if prows != rows else out


# ----------------------------------------------------------------------------
# Module-level wrapper: x + dropout(sublayer(LayerNorm(x)))
# ----------------------------------------------------------------------------
def residual_connection(x, sublayer, *, dropout_rate, alpha, bias,
                        eps=1e-6, key=None, training=True):
    # TODO(synk): if `sublayer` is a known matmul/MLP, LN could be fused into its
    # prologue and dropout+residual into its epilogue (single pallas_call); kept
    # separate here because `sublayer` is an arbitrary callable.
    orig_shape = x.shape
    d = orig_shape[-1]
    x2d = x.reshape(-1, d)

    normed = pallas_layernorm(x2d, alpha, bias, eps).reshape(orig_shape)
    sub_out = sublayer(normed).reshape(-1, d)

    if training and dropout_rate > 0.0:
        if key is None:
            key = jax.random.PRNGKey(0)
        # TODO(synk): dropout mask RNG cannot bitwise-match torch's RNG stream.
        bits = jax.random.bits(key, x2d.shape, dtype=jnp.uint32)
        out2d = pallas_dropout_residual(x2d, sub_out, dropout_rate, bits)
    else:
        out2d = pallas_residual_add(x2d, sub_out)
    return out2d.reshape(orig_shape)


# ----------------------------------------------------------------------------
# Demo / self-check
# ----------------------------------------------------------------------------
if __name__ == "__main__":
    B, S, D = 2, 8, 32
    key = jax.random.PRNGKey(0)
    kx, kw, kd = jax.random.split(key, 3)

    x = jax.random.normal(kx, (B, S, D), dtype=jnp.float32)

    # Deterministic example sublayer (a small linear projection).
    W = jax.random.normal(kw, (D, D), dtype=jnp.float32) * 0.02
    b = jnp.zeros((D,), dtype=jnp.float32)
    sublayer = lambda h: jnp.dot(h, W) + b

    # LayerNormalization parameters: alpha = ones(1), bias = zeros(1).
    alpha = jnp.ones((1,), dtype=jnp.float32)
    bias = jnp.zeros((1,), dtype=jnp.float32)
    rate = 0.1
    eps = 1e-6

    def ln_ref(v):
        mean = v.mean(-1, keepdims=True)
        var = jnp.sum((v - mean) ** 2, axis=-1, keepdims=True) / (D - 1)  # unbiased
        return alpha[0] * (v - mean) / jnp.sqrt(var + eps) + bias[0]

    # --- eval mode (dropout disabled) vs pure-JAX reference ---
    out_eval = residual_connection(
        x, sublayer, dropout_rate=rate, alpha=alpha, bias=bias, training=False
    )
    jax.block_until_ready(out_eval)
    ref_eval = x + sublayer(ln_ref(x))
    assert jnp.allclose(out_eval, ref_eval, atol=1e-4, rtol=1e-4), "eval mismatch"

    # --- training mode: replicate the same mask bits in plain JAX and compare ---
    out_train = residual_connection(
        x, sublayer, dropout_rate=rate, alpha=alpha, bias=bias,
        training=True, key=kd
    )
    jax.block_until_ready(out_train)
    thresh = min(int(round(rate * 4294967296.0)), 4294967295)
    bits = jax.random.bits(kd, (B * S, D), dtype=jnp.uint32)
    keep = (bits >= jnp.uint32(thresh)).reshape(B, S, D)
    ref_train = x + jnp.where(keep, sublayer(ln_ref(x)) / (1.0 - rate), 0.0)
    assert jnp.allclose(out_train, ref_train, atol=1e-4, rtol=1e-4), "train mismatch"
    assert out_train.shape == x.shape and bool(jnp.all(jnp.isfinite(out_train)))

    print("KERNEL_OK")
</pallas_src>

<mosaic_0001>
module attributes {stable_mosaic.version = 11 : i64} {
  func.func @_layernorm_kernel(%arg0: i32, %arg1: memref<1xf32, #tpu.memory_space<smem>>, %arg2: memref<1xf32, #tpu.memory_space<smem>>, %arg3: memref<16x32xf32, #tpu.memory_space<vmem>>, %arg4: memref<16x32xf32, #tpu.memory_space<vmem>>) attributes {dimension_semantics = [#tpu.dimension_semantics<parallel>], iteration_bounds = array<i64: 1>, scalar_prefetch = 0 : i64, scratch_operands = 0 : i64, tpu.core_type = #tpu.core_type<tc>, window_params = [{transform_indices = @transform_0, window_bounds = array<i64: 1>}, {transform_indices = @transform_1, window_bounds = array<i64: 1>}, {transform_indices = @transform_2, window_bounds = array<i64: 16, 32>}, {transform_indices = @transform_3, window_bounds = array<i64: 16, 32>}]} {
    %c0 = arith.constant 0 : index
    %c0_0 = arith.constant 0 : index
    %0 = vector.load %arg3[%c0, %c0_0] : memref<16x32xf32, #tpu.memory_space<vmem>>, vector<16x32xf32>
    %cst = arith.constant dense<0.000000e+00> : vector<16xf32>
    %1 = vector.multi_reduction <add>, %0, %cst [1] : vector<16x32xf32> to vector<16xf32>
    %2 = vector.shape_cast %1 : vector<16xf32> to vector<16x1xf32>
    %3 = arith.mulf %0, %0 : vector<16x32xf32>
    %cst_1 = arith.constant dense<0.000000e+00> : vector<16xf32>
    %4 = vector.multi_reduction <add>, %3, %cst_1 [1] : vector<16x32xf32> to vector<16xf32>
    %5 = vector.shape_cast %4 : vector<16xf32> to vector<16x1xf32>
    %cst_2 = arith.constant 3.125000e-02 : f32
    %6 = vector.broadcast %cst_2 : f32 to vector<16x1xf32>
    %7 = arith.mulf %2, %6 : vector<16x1xf32>
    %cst_3 = arith.constant 3.200000e+01 : f32
    %8 = vector.broadcast %cst_3 : f32 to vector<16x1xf32>
    %9 = arith.mulf %8, %7 : vector<16x1xf32>
    %10 = arith.mulf %9, %7 : vector<16x1xf32>
    %11 = arith.subf %5, %10 : vector<16x1xf32>
    %cst_4 = arith.constant 0.0322580636 : f32
    %12 = vector.broadcast %cst_4 : f32 to vector<16x1xf32>
    %13 = arith.mulf %11, %12 : vector<16x1xf32>
    %cst_5 = arith.constant 9.99999997E-7 : f32
    %14 = vector.broadcast %cst_5 : f32 to vector<16x1xf32>
    %15 = arith.addf %13, %14 : vector<16x1xf32>
    %16 = math.rsqrt %15 : vector<16x1xf32>
    %c0_6 = arith.constant 0 : index
    %17 = memref.load %arg1[%c0_6] : memref<1xf32, #tpu.memory_space<smem>>
    %18 = vector.broadcast %7 : vector<16x1xf32> to vector<16x32xf32>
    %19 = arith.subf %0, %18 : vector<16x32xf32>
    %20 = vector.broadcast %17 : f32 to vector<16x32xf32>
    %21 = arith.mulf %20, %19 : vector<16x32xf32>
    %22 = vector.broadcast %16 : vector<16x1xf32> to vector<16x32xf32>
    %23 = arith.mulf %21, %22 : vector<16x32xf32>
    %c0_7 = arith.constant 0 : index
    %24 = memref.load %arg2[%c0_7] : memref<1xf32, #tpu.memory_space<smem>>
    %25 = vector.broadcast %24 : f32 to vector<16x32xf32>
    %26 = arith.addf %23, %25 : vector<16x32xf32>
    %c0_8 = arith.constant 0 : index
    %c0_9 = arith.constant 0 : index
    %27 = vector.load %arg4[%c0_8, %c0_9] : memref<16x32xf32, #tpu.memory_space<vmem>>, vector<16x32xf32>
    tpu.vector_store %arg4[%c0_8, %c0_9], %26 {strides = array<i32>} : memref<16x32xf32, #tpu.memory_space<vmem>>, vector<16x32xf32>,
    return
  }
  func.func @transform_0(%arg0: i32) -> i32 {
    %c0_i32 = arith.constant 0 : i32
    %c0_i32_0 = arith.constant 0 : i32
    return %c0_i32 : i32
  }
  func.func @transform_1(%arg0: i32) -> i32 {
    %c0_i32 = arith.constant 0 : i32
    %c0_i32_0 = arith.constant 0 : i32
    return %c0_i32 : i32
  }
  func.func @transform_2(%arg0: i32) -> (i32, i32) {
    %c0_i32 = arith.constant 0 : i32
    %c0_i32_0 = arith.constant 0 : i32
    return %arg0, %c0_i32 : i32, i32
  }
  func.func @transform_3(%arg0: i32) -> (i32, i32) {
    %c0_i32 = arith.constant 0 : i32
    %c0_i32_0 = arith.constant 0 : i32
    return %arg0, %c0_i32 : i32, i32
  }
}

</mosaic_0001>

<llo_original>
// kernel: tpu_custom_call.1
$region0: #{tpu_custom_call.1}
  #allocation0 [shape = 'u32[]', space=smem, size = 0x4, offset = 0x4, fixed_abs, tag = 'smem constant byte address 0x4 - core index']
  #allocation1 [shape = 'u32[144,128]{1,0:T(1,128)}', space=vmem, size = 0x12000, scoped, tag = 'internal scratch']
  #allocation2 [shape = 'f32[1]{0:T(128)S(6)}', space=smem, size = 0x200, scoped, tag = 'scoped memory for tpu_custom_call.1']
  #allocation3 [shape = 'f32[1]{0:T(128)S(6)}', space=smem, size = 0x200, scoped, tag = 'scoped memory for tpu_custom_call.1']
  %s0 = inlined_call_operand.<no memory space> [shape: f32[1], index: 0, kind: input, shape index: {}]
  %s1 = inlined_call_operand.<no memory space> [shape: f32[1], index: 1, kind: input, shape index: {}]
  %s2 = inlined_call_operand.hbm [shape: f32[16,32], index: 2, kind: input, shape index: {}]
  %s3 = inlined_call_operand.hbm [shape: f32[16,32], index: 3, kind: output, shape index: {}]
  %s4 = sld [smem:[#allocation0]]
  $region26: #{tpu_custom_call.1} parent=0
    _
  %s6 = ssub.s32 1, %s4
  %s7 = scalar_select 0, %s6, %s4
  %8 = sst [smem:[#allocation2]] %s0
  %9 = sst [smem:[#allocation3]] %s1
  $region1: #{tpu_custom_call.1} parent=0
    #allocation4 [shape = 'u8[8192]{0}', space=vmem, size = 0x2000, scoped, tag = 'input window, operand 2, single buffered']
    #allocation5 [shape = 's32[1]{0}', space=sflag, size = 0x4, scoped, tag = 'scoped memory for tpu_custom_call.1']
    #allocation6 [shape = 's32[1]{0}', space=sflag, size = 0x4, scoped, tag = 'scoped memory for tpu_custom_call.1']
    #allocation7 [shape = 'u8[8192]{0}', space=vmem, size = 0x2000, scoped, tag = 'output window, operand 0, single buffered']
    %10 = vsyncpa [#allocation5], 0
    %11 = vsyncpa [#allocation6], 0
    // Predicated region
    $region2: #{tpu_custom_call.1} parent=1 // pred_check
      _
    $region3: #{tpu_custom_call.1} parent=1 // pred_check_branch
      %13 = sbr.rel (0) target = $region5
    $region4: #{tpu_custom_call.1} parent=1 // pred_region
      _
    $region5: #{tpu_custom_call.1} parent=1 // pred_fallthru
      _
    // Predicated region
    $region6: #{tpu_custom_call.1} parent=1 // pred_check
      _
    $region7: #{tpu_custom_call.1} parent=1 // pred_check_branch
      %15 = sbr.rel (0) target = $region9
    $region8: #{tpu_custom_call.1} parent=1 // pred_region
      _
    $region9: #{tpu_custom_call.1} parent=1 // pred_fallthru
      _
    // Predicated region
    $region10: #{tpu_custom_call.1} parent=1 // pred_check
      _
    $region11: #{tpu_custom_call.1} parent=1 // pred_check_branch
      %17 = sbr.rel (0) target = $region13
    $region12: #{tpu_custom_call.1} parent=1 // pred_region
      %s19 = ssub.s32 256, 256
      %20 = vsyncadd [#allocation5], %s19
      %s21 = sshll.u32 [#allocation4], 4
      %s22 = int_to_ptr.vmem [resolvable:$true] %s21
      %27 = dma.hbm_to_vmem [thread:$0]  %s2, 256, %s22, [#allocation5], 128, 128, 8
    $region13: #{tpu_custom_call.1} parent=1 // pred_fallthru
      _
    // Predicated region
    $region14: #{tpu_custom_call.1} parent=1 // pred_check
      _
    $region15: #{tpu_custom_call.1} parent=1 // pred_check_branch
      %29 = sbr.rel (0) target = $region17
    $region16: #{tpu_custom_call.1} parent=1 // pred_region
      %30 = dma.done [#allocation5], 256
    $region17: #{tpu_custom_call.1} parent=1 // pred_fallthru
      _
    %v31 = vld [vmem:[#allocation4] sm:$0xff]
    %v32 = vld [vmem:[#allocation4 + $0x8] sm:$0xff]
    %vm33 = vcmask 261120
    %v34 = vsel %vm33, %v31, 0.0
    %35 = vadd.xlane.f32.xlu0 %v34
    %v36 = vpop.xlane.xlu0 %35
    %v37 = vsel %vm33, %v32, 0.0
    %38 = vadd.xlane.f32.xlu0 %v37
    %v39 = vpop.xlane.xlu0 %38
    %v40 = vmul.f32 %v31, %v31
    %v41 = vmul.f32 %v32, %v32
    %v42 = vsel %vm33, %v40, 0.0
    %43 = vadd.xlane.f32.xlu0 %v42
    %v44 = vpop.xlane.xlu0 %43
    %v45 = vsel %vm33, %v41, 0.0
    %46 = vadd.xlane.f32.xlu0 %v45
    %v47 = vpop.xlane.xlu0 %46
    %v48 = vmul.f32 %v36, 0.03125
    %v49 = vmul.f32 %v39, 0.03125
    %v50 = vmul.f32 %v48, 32.0
    %v51 = vmul.f32 %v49, 32.0
    %v52 = vmul.f32 %v50, %v48
    %v53 = vmul.f32 %v51, %v49
    %v54 = vsub.f32 %v44, %v52
    %v55 = vsub.f32 %v47, %v53
    %v56 = vmul.f32 %v54, 0.032258064
    %v57 = vmul.f32 %v55, 0.032258064
    %v58 = vadd.f32 %v56, 1e-06
    %v59 = vadd.f32 %v57, 1e-06
    %v60 = vrsqrt.pop %v58
    %v61 = vrsqrt.pop %v59
    %s62 = sld [smem:[#allocation2]]
    %v63 = vsub.f32 %v31, %v48
    %v64 = vsub.f32 %v32, %v49
    %v65 = vstv %s62
    %v66 = vmul.f32 %v65, %v63
    %v67 = vmul.f32 %v65, %v64
    %v68 = vmul.f32 %v66, %v60
    %v69 = vmul.f32 %v67, %v61
    %s70 = sld [smem:[#allocation3]]
    %v71 = vstv %s70
    %v72 = vadd.f32 %v68, %v71
    %v73 = vadd.f32 %v69, %v71
    %74 = vst.msk [vmem:[#allocation7] sm:$0xff] %vm33, %v72
    %75 = vst.msk [vmem:[#allocation7 + $0x8] sm:$0xff] %vm33, %v73
    // Predicated region
    $region18: #{tpu_custom_call.1} parent=1 // pred_check
      _
    $region19: #{tpu_custom_call.1} parent=1 // pred_check_branch
      %77 = sbr.rel (0) target = $region21
    $region20: #{tpu_custom_call.1} parent=1 // pred_region
      %s79 = ssub.s32 256, 256
      %80 = vsyncadd [#allocation6], %s79
      %s81 = sshll.u32 [#allocation7], 4
      %s82 = int_to_ptr.vmem [resolvable:$true] %s81
      %87 = dma.vmem_to_hbm [thread:$0]  %s82, 256, %s3, [#allocation6], 128, 128, 8
    $region21: #{tpu_custom_call.1} parent=1 // pred_fallthru
      _
    // Predicated region
    $region22: #{tpu_custom_call.1} parent=1 // pred_check
      _
    $region23: #{tpu_custom_call.1} parent=1 // pred_check_branch
      %89 = sbr.rel (0) target = $region25
    $region24: #{tpu_custom_call.1} parent=1 // pred_region
      %90 = dma.done [#allocation6], 256
    $region25: #{tpu_custom_call.1} parent=1 // pred_fallthru
      _
    %91 = vsyncpa [#allocation5], 1
    %92 = vsyncpa [#allocation6], 1

</llo_original>
